<compile_context>
chip_gen: v7x
topology: tpu7x:2x2x1
jax: 0.10.0
libtpu: 0.0.40
codegen_flags: <defaults>
</compile_context>

<pallas_src>
import functools

import jax
import jax.numpy as jnp
from jax.experimental import pallas as pl
from jax.experimental.pallas import tpu as pltpu

_LANE = 128
_SUBLANE = 8


def _ceil_div(a, b):
    return -(-a // b)


def _round_up(a, b):
    return _ceil_div(a, b) * b


# ----------------------------------------------------------------------------
# Kernel 1: fused Conv1d (tap-fused im2col matmul) + bias + ReLU + BN statistics.
#   x_ref   : (1, L_in_pad, C_in)      full padded sequence of this batch element
#   w_ref   : (context*C_in, O_pad)    tap-fused conv weight
#   b_ref   : (1, O_pad)               conv bias
#   y_ref   : (1, TL, O_pad)           conv+ReLU output tile
#   sum_ref : (1, 1, O_pad)            per-batch channel sum  (accumulated over t)
#   sq_ref  : (1, 1, O_pad)            per-batch channel sumsq (accumulated over t)
# ----------------------------------------------------------------------------
def _conv_relu_stats_kernel(x_ref, w_ref, b_ref, y_ref, sum_ref, sq_ref, *,
                            context_size, dilation, stride, time_tile, l_out,
                            cast_bf16):
    t = pl.program_id(1)
    row0 = t * time_tile                         # first output row of this tile

    @pl.when(t == 0)
    def _init_stats():
        sum_ref[...] = jnp.zeros_like(sum_ref)
        sq_ref[...] = jnp.zeros_like(sq_ref)

    # im2col: concatenate context taps along channels -> one big-K MXU matmul.
    span = (time_tile - 1) * stride + 1          # contiguous rows needed per tap
    taps = []
    for k in range(context_size):                # static unroll over taps
        start = row0 * stride + k * dilation
        chunk = x_ref[0, pl.ds(start, span), :]
        if stride > 1:
            chunk = chunk[::stride]              # static subsample on the VMEM tile
        taps.append(chunk)
    xt = jnp.concatenate(taps, axis=-1)          # (TL, context*C_in)

    w = w_ref[...]
    if cast_bf16:
        xt = xt.astype(jnp.bfloat16)
        w = w.astype(jnp.bfloat16)

    acc = jnp.dot(xt, w, preferred_element_type=jnp.float32)
    acc = acc + b_ref[...].astype(jnp.float32)   # single bias add (broadcast (1,O))
    y = jnp.maximum(acc, 0.0)
    y_ref[0] = y.astype(y_ref.dtype)

    # Channel statistics over *valid* rows only (last tile may contain pad rows).
    ridx = jax.lax.broadcasted_iota(jnp.int32, (time_tile, 1), 0) + row0
    ym = jnp.where(ridx < l_out, y, 0.0)
    sum_ref[0] += jnp.sum(ym, axis=0, keepdims=True)
    sq_ref[0] += jnp.sum(ym * ym, axis=0, keepdims=True)


# ----------------------------------------------------------------------------
# Kernel 2: tiled BatchNorm apply — one fused multiply-add per element.
#   y_ref     : (1, TL, O_pad)
#   scale_ref : (1, O_pad)   gamma * rsqrt(var + eps)
#   shift_ref : (1, O_pad)   beta - mean * scale
#   o_ref     : (1, TL, O_pad)   (aliased with y_ref's HBM buffer)
# ----------------------------------------------------------------------------
def _bn_apply_kernel(y_ref, scale_ref, shift_ref, o_ref):
    y = y_ref[0].astype(jnp.float32)
    o_ref[0] = (y * scale_ref[...] + shift_ref[...]).astype(o_ref.dtype)


# ----------------------------------------------------------------------------
# Wrapper
# ----------------------------------------------------------------------------
def tdnn_layer_forward(x, conv_w, conv_b, bn_gamma, bn_beta, *,
                       context_size, stride=1, dilation=1, padding=0,
                       batch_norm=True, eps=1e-5, time_tile=256,
                       cast_matmul_bf16=False):
    """x: (batch, seq_len, input_dim) -> (batch, new_seq_len, output_dim)."""
    B, L, C = x.shape
    O = conv_w.shape[0]                          # conv_w: (out, in, kernel) as in PyTorch
    assert conv_w.shape == (O, C, context_size)

    l_out = (L + 2 * padding - dilation * (context_size - 1) - 1) // stride + 1
    assert l_out > 0, "sequence too short for this context/dilation"

    # ---- tiling / padding choices -------------------------------------------
    O_pad = _round_up(O, _LANE)                  # lane-dense output stores
    n_t = _ceil_div(l_out, max(time_tile, _SUBLANE))
    tl = _round_up(_ceil_div(l_out, n_t), _SUBLANE)
    l_out_pad = n_t * tl

    # Input rows the kernel may touch (including zero rows behind the padded tail).
    l_in_req = (l_out_pad - 1) * stride + dilation * (context_size - 1) + 1
    extra = max(0, l_in_req - (L + 2 * padding))
    x_pad = jnp.pad(x, ((0, 0), (padding, padding + extra), (0, 0)))
    L_in_pad = L + 2 * padding + extra

    # Tap-fused weights: (O, C, K) -> (K, C, O) -> (K*C, O_pad); pad bias too.
    w_kco = jnp.transpose(conv_w, (2, 1, 0))
    w_kco = jnp.pad(w_kco, ((0, 0), (0, 0), (0, O_pad - O)))
    w2 = w_kco.reshape(context_size * C, O_pad)
    b2 = jnp.pad(conv_b, (0, O_pad - O)).reshape(1, O_pad)

    kc = context_size * C
    itemsize = jnp.dtype(x.dtype).itemsize

    conv_kernel = functools.partial(
        _conv_relu_stats_kernel, context_size=context_size, dilation=dilation,
        stride=stride, time_tile=tl, l_out=l_out, cast_bf16=cast_matmul_bf16)

    # Explicit scoped-VMEM budget from the actual block footprint (x2 for
    # double buffering), capped at v7x physical (64 MiB).
    conv_vmem = 2 * (L_in_pad * C * itemsize + kc * O_pad * itemsize
                     + O_pad * itemsize + tl * O_pad * itemsize
                     + 2 * O_pad * 4)
    conv_vmem_limit = int(min(64 << 20, max(conv_vmem + (4 << 20), 16 << 20)))

    y_pad, ch_sum, ch_sq = pl.pallas_call(
        conv_kernel,
        out_shape=(
            jax.ShapeDtypeStruct((B, l_out_pad, O_pad), x.dtype),
            jax.ShapeDtypeStruct((B, 1, O_pad), jnp.float32),
            jax.ShapeDtypeStruct((B, 1, O_pad), jnp.float32),
        ),
        grid=(B, n_t),
        in_specs=[
            # Whole (small) input sequence stays resident per batch element;
            # its block index ignores t, so no re-DMA across time tiles.
            pl.BlockSpec((1, L_in_pad, C), lambda b, t: (b, 0, 0)),
            pl.BlockSpec((kc, O_pad), lambda b, t: (0, 0)),
            pl.BlockSpec((1, O_pad), lambda b, t: (0, 0)),
        ],
        out_specs=(
            pl.BlockSpec((1, tl, O_pad), lambda b, t: (b, t, 0)),
            pl.BlockSpec((1, 1, O_pad), lambda b, t: (b, 0, 0)),   # accum over t
            pl.BlockSpec((1, 1, O_pad), lambda b, t: (b, 0, 0)),   # accum over t
        ),
        compiler_params=pltpu.CompilerParams(
            dimension_semantics=("parallel", "arbitrary"),
            vmem_limit_bytes=conv_vmem_limit),
    )(x_pad, w2, b2)

    # Dropout(p=0.0) == identity.

    if not batch_norm:
        return y_pad[:, :l_out, :O]

    # ---- fold training-mode BatchNorm into per-channel scale / shift ---------
    n = B * l_out
    mean = jnp.sum(ch_sum, axis=0) / n                          # (1, O_pad)
    var = jnp.sum(ch_sq, axis=0) / n - mean * mean              # biased variance
    gamma = jnp.pad(bn_gamma, (0, O_pad - O)).reshape(1, O_pad).astype(jnp.float32)
    beta = jnp.pad(bn_beta, (0, O_pad - O)).reshape(1, O_pad).astype(jnp.float32)
    scale = gamma * jax.lax.rsqrt(var + eps)
    shift = beta - mean * scale

    bn_vmem = 2 * (2 * tl * O_pad * itemsize + 2 * O_pad * 4)
    bn_vmem_limit = int(min(64 << 20, max(bn_vmem + (4 << 20), 16 << 20)))

    y_bn = pl.pallas_call(
        _bn_apply_kernel,
        out_shape=jax.ShapeDtypeStruct((B, l_out_pad, O_pad), x.dtype),
        grid=(B, n_t),
        in_specs=[
            pl.BlockSpec((1, tl, O_pad), lambda b, t: (b, t, 0)),
            pl.BlockSpec((1, O_pad), lambda b, t: (0, 0)),
            pl.BlockSpec((1, O_pad), lambda b, t: (0, 0)),
        ],
        out_specs=pl.BlockSpec((1, tl, O_pad), lambda b, t: (b, t, 0)),
        input_output_aliases={0: 0},        # normalize y in place (no 2nd HBM buffer)
        compiler_params=pltpu.CompilerParams(
            dimension_semantics=("parallel", "parallel"),
            vmem_limit_bytes=bn_vmem_limit),
    )(y_pad, scale, shift)

    return y_bn[:, :l_out, :O]


# ----------------------------------------------------------------------------
# Pure-JAX reference (for sanity check only)
# ----------------------------------------------------------------------------
def _reference(x, conv_w, conv_b, bn_gamma, bn_beta, *, context_size, stride,
               dilation, padding, batch_norm, eps=1e-5):
    B, L, C = x.shape
    if padding:
        x = jnp.pad(x, ((0, 0), (padding, padding), (0, 0)))
    L_pad = L + 2 * padding
    l_out = (L_pad - dilation * (context_size - 1) - 1) // stride + 1
    taps = []
    for k in range(context_size):
        start = k * dilation
        taps.append(x[:, start:start + (l_out - 1) * stride + 1:stride, :])
    xu = jnp.stack(taps, axis=2)                      # (B, L_out, K, C)
    # conv_w is (O, C_in, K): contract over c (channels) and k (taps).
    y = jnp.einsum("blkc,ock->blo", xu, conv_w) + conv_b[None, None, :]
    y = jnp.maximum(y, 0.0)
    if batch_norm:
        mean = jnp.mean(y, axis=(0, 1), keepdims=True)
        var = jnp.mean((y - mean) ** 2, axis=(0, 1), keepdims=True)
        y = (y - mean) * jax.lax.rsqrt(var + eps) * bn_gamma[None, None, :] \
            + bn_beta[None, None, :]
    return y


if __name__ == "__main__":
    # Small, self-consistent shapes.
    batch, seq_len = 2, 16
    input_dim, output_dim = 16, 32
    context_size, stride, dilation, padding = 5, 1, 1, 0

    key = jax.random.PRNGKey(0)
    kx, kw, kb = jax.random.split(key, 3)

    x = jax.random.normal(kx, (batch, seq_len, input_dim), dtype=jnp.float32)

    # Deterministic Conv1d-style init: U(-bound, bound), bound = 1/sqrt(fan_in).
    fan_in = input_dim * context_size
    bound = 1.0 / (fan_in ** 0.5)
    conv_w = jax.random.uniform(kw, (output_dim, input_dim, context_size),
                                dtype=jnp.float32, minval=-bound, maxval=bound)
    conv_b = jax.random.uniform(kb, (output_dim,), dtype=jnp.float32,
                                minval=-bound, maxval=bound)
    bn_gamma = jnp.ones((output_dim,), jnp.float32)
    bn_beta = jnp.zeros((output_dim,), jnp.float32)

    out = tdnn_layer_forward(
        x, conv_w, conv_b, bn_gamma, bn_beta,
        context_size=context_size, stride=stride, dilation=dilation,
        padding=padding, batch_norm=True)
    out = jax.block_until_ready(out)

    ref = _reference(
        x, conv_w, conv_b, bn_gamma, bn_beta,
        context_size=context_size, stride=stride, dilation=dilation,
        padding=padding, batch_norm=True)

    expected_l_out = (seq_len + 2 * padding
                      - dilation * (context_size - 1) - 1) // stride + 1
    assert out.shape == (batch, expected_l_out, output_dim), out.shape
    assert jnp.allclose(out, ref, atol=1e-4, rtol=1e-4), \
        float(jnp.max(jnp.abs(out - ref)))

    print("KERNEL_OK")
</pallas_src>

<mosaic_0001>
module attributes {stable_mosaic.version = 11 : i64} {
  func.func @_conv_relu_stats_kernel(%arg0: i32, %arg1: i32, %arg2: memref<1x20x16xf32, #tpu.memory_space<vmem>>, %arg3: memref<80x128xf32, #tpu.memory_space<vmem>>, %arg4: memref<1x128xf32, #tpu.memory_space<vmem>>, %arg5: memref<1x16x128xf32, #tpu.memory_space<vmem>>, %arg6: memref<1x1x128xf32, #tpu.memory_space<vmem>>, %arg7: memref<1x1x128xf32, #tpu.memory_space<vmem>>) attributes {dimension_semantics = [#tpu.dimension_semantics<parallel>, #tpu.dimension_semantics<arbitrary>], iteration_bounds = array<i64: 2, 1>, scalar_prefetch = 0 : i64, scratch_operands = 0 : i64, tpu.core_type = #tpu.core_type<tc>, window_params = [{transform_indices = @transform_0, window_bounds = array<i64: 1, 20, 16>}, {pipeline_mode = #tpu.pipeline_mode<synchronous>, transform_indices = @transform_1, window_bounds = array<i64: 80, 128>}, {pipeline_mode = #tpu.pipeline_mode<synchronous>, transform_indices = @transform_2, window_bounds = array<i64: 1, 128>}, {transform_indices = @transform_3, window_bounds = array<i64: 1, 16, 128>}, {transform_indices = @transform_4, window_bounds = array<i64: 1, 1, 128>}, {transform_indices = @transform_5, window_bounds = array<i64: 1, 1, 128>}]} {
    %c16_i32 = arith.constant 16 : i32
    %0 = arith.muli %arg1, %c16_i32 : i32
    %c0_i32 = arith.constant 0 : i32
    %1 = arith.cmpi eq, %arg1, %c0_i32 : i32
    %2 = arith.extui %1 : i1 to i32
    %c0_i32_0 = arith.constant 0 : i32
    %3 = arith.cmpi ne, %2, %c0_i32_0 : i32
    scf.if %3 {
      %cst_39 = arith.constant 0.000000e+00 : f32
      %66 = vector.broadcast %cst_39 : f32 to vector<1x1x128xf32>
      %c0_40 = arith.constant 0 : index
      %c0_41 = arith.constant 0 : index
      %c0_42 = arith.constant 0 : index
      %67 = vector.load %arg6[%c0_40, %c0_41, %c0_42] : memref<1x1x128xf32, #tpu.memory_space<vmem>>, vector<1x1x128xf32>
      tpu.vector_store %arg6[%c0_40, %c0_41, %c0_42], %66 {strides = array<i32>} : memref<1x1x128xf32, #tpu.memory_space<vmem>>, vector<1x1x128xf32>,
      %cst_43 = arith.constant 0.000000e+00 : f32
      %68 = vector.broadcast %cst_43 : f32 to vector<1x1x128xf32>
      %c0_44 = arith.constant 0 : index
      %c0_45 = arith.constant 0 : index
      %c0_46 = arith.constant 0 : index
      %69 = vector.load %arg7[%c0_44, %c0_45, %c0_46] : memref<1x1x128xf32, #tpu.memory_space<vmem>>, vector<1x1x128xf32>
      tpu.vector_store %arg7[%c0_44, %c0_45, %c0_46], %68 {strides = array<i32>} : memref<1x1x128xf32, #tpu.memory_space<vmem>>, vector<1x1x128xf32>,
    } else {
    }
    %c1_i32 = arith.constant 1 : i32
    %4 = arith.muli %0, %c1_i32 : i32
    %c0_i32_1 = arith.constant 0 : i32
    %5 = arith.addi %4, %c0_i32_1 : i32
    %c0 = arith.constant 0 : index
    %6 = arith.index_cast %5 : i32 to index
    %c0_2 = arith.constant 0 : index
    %7 = vector.load %arg2[%c0, %6, %c0_2] : memref<1x20x16xf32, #tpu.memory_space<vmem>>, vector<1x16x16xf32>
    %8 = vector.shape_cast %7 : vector<1x16x16xf32> to vector<16x16xf32>
    %c1_i32_3 = arith.constant 1 : i32
    %9 = arith.muli %0, %c1_i32_3 : i32
    %c1_i32_4 = arith.constant 1 : i32
    %10 = arith.addi %9, %c1_i32_4 : i32
    %c0_5 = arith.constant 0 : index
    %11 = arith.index_cast %10 : i32 to index
    %c0_6 = arith.constant 0 : index
    %12 = vector.load %arg2[%c0_5, %11, %c0_6] : memref<1x20x16xf32, #tpu.memory_space<vmem>>, vector<1x16x16xf32>
    %13 = vector.shape_cast %12 : vector<1x16x16xf32> to vector<16x16xf32>
    %c1_i32_7 = arith.constant 1 : i32
    %14 = arith.muli %0, %c1_i32_7 : i32
    %c2_i32 = arith.constant 2 : i32
    %15 = arith.addi %14, %c2_i32 : i32
    %c0_8 = arith.constant 0 : index
    %16 = arith.index_cast %15 : i32 to index
    %c0_9 = arith.constant 0 : index
    %17 = vector.load %arg2[%c0_8, %16, %c0_9] : memref<1x20x16xf32, #tpu.memory_space<vmem>>, vector<1x16x16xf32>
    %18 = vector.shape_cast %17 : vector<1x16x16xf32> to vector<16x16xf32>
    %c1_i32_10 = arith.constant 1 : i32
    %19 = arith.muli %0, %c1_i32_10 : i32
    %c3_i32 = arith.constant 3 : i32
    %20 = arith.addi %19, %c3_i32 : i32
    %c0_11 = arith.constant 0 : index
    %21 = arith.index_cast %20 : i32 to index
    %c0_12 = arith.constant 0 : index
    %22 = vector.load %arg2[%c0_11, %21, %c0_12] : memref<1x20x16xf32, #tpu.memory_space<vmem>>, vector<1x16x16xf32>
    %23 = vector.shape_cast %22 : vector<1x16x16xf32> to vector<16x16xf32>
    %c1_i32_13 = arith.constant 1 : i32
    %24 = arith.muli %0, %c1_i32_13 : i32
    %c4_i32 = arith.constant 4 : i32
    %25 = arith.addi %24, %c4_i32 : i32
    %c0_14 = arith.constant 0 : index
    %26 = arith.index_cast %25 : i32 to index
    %c0_15 = arith.constant 0 : index
    %27 = vector.load %arg2[%c0_14, %26, %c0_15] : memref<1x20x16xf32, #tpu.memory_space<vmem>>, vector<1x16x16xf32>
    %28 = vector.shape_cast %27 : vector<1x16x16xf32> to vector<16x16xf32>
    %29 = tpu.concatenate %8, %13, %18, %23, %28 in 1 : vector<16x16xf32>, vector<16x16xf32>, vector<16x16xf32>, vector<16x16xf32>, vector<16x16xf32> -> vector<16x80xf32>
    %c0_16 = arith.constant 0 : index
    %c0_17 = arith.constant 0 : index
    %30 = vector.load %arg3[%c0_16, %c0_17] : memref<80x128xf32, #tpu.memory_space<vmem>>, vector<80x128xf32>
    %cst = arith.constant dense<0.000000e+00> : vector<16x128xf32>
    %31 = tpu.matmul %29, %30, %cst {dimension_numbers = #tpu.dot_dimension_numbers<[1], [0], [0], [1], [0, 0, 1, 1], [], []>} : vector<16x80xf32>, vector<80x128xf32>, vector<16x128xf32> -> vector<16x128xf32>
    %c0_18 = arith.constant 0 : index
    %c0_19 = arith.constant 0 : index
    %32 = vector.load %arg4[%c0_18, %c0_19] : memref<1x128xf32, #tpu.memory_space<vmem>>, vector<1x128xf32>
    %33 = vector.broadcast %32 : vector<1x128xf32> to vector<16x128xf32>
    %34 = arith.addf %31, %33 : vector<16x128xf32>
    %cst_20 = arith.constant 0.000000e+00 : f32
    %35 = vector.broadcast %cst_20 : f32 to vector<16x128xf32>
    %36 = arith.maximumf %34, %35 : vector<16x128xf32>
    %c0_21 = arith.constant 0 : index
    %c0_22 = arith.constant 0 : index
    %c0_23 = arith.constant 0 : index
    %37 = vector.load %arg5[%c0_21, %c0_22, %c0_23] : memref<1x16x128xf32, #tpu.memory_space<vmem>>, vector<1x16x128xf32>
    %38 = vector.shape_cast %37 : vector<1x16x128xf32> to vector<16x128xf32>
    %39 = vector.shape_cast %36 : vector<16x128xf32> to vector<1x16x128xf32>
    tpu.vector_store %arg5[%c0_21, %c0_22, %c0_23], %39 {strides = array<i32>} : memref<1x16x128xf32, #tpu.memory_space<vmem>>, vector<1x16x128xf32>,
    %40 = tpu.iota {dimensions = array<i32: 0>} : vector<16x1xi32>
    %41 = vector.broadcast %0 : i32 to vector<16x1xi32>
    %42 = arith.addi %40, %41 : vector<16x1xi32>
    %c12_i32 = arith.constant 12 : i32
    %43 = vector.broadcast %c12_i32 : i32 to vector<16x1xi32>
    %44 = arith.cmpi slt, %42, %43 : vector<16x1xi32>
    %cst_24 = arith.constant 0.000000e+00 : f32
    %45 = vector.shape_cast %44 : vector<16x1xi1> to vector<16x1xi1>
    %46 = vector.broadcast %45 : vector<16x1xi1> to vector<16x128xi1>
    %47 = vector.broadcast %cst_24 : f32 to vector<16x128xf32>
    %48 = arith.select %46, %36, %47 : vector<16x128xi1>, vector<16x128xf32>
    %c0_25 = arith.constant 0 : index
    %c0_26 = arith.constant 0 : index
    %c0_27 = arith.constant 0 : index
    %49 = vector.load %arg6[%c0_25, %c0_26, %c0_27] : memref<1x1x128xf32, #tpu.memory_space<vmem>>, vector<1x1x128xf32>
    %50 = vector.shape_cast %49 : vector<1x1x128xf32> to vector<1x128xf32>
    %cst_28 = arith.constant dense<0.000000e+00> : vector<128xf32>
    %51 = vector.multi_reduction <add>, %48, %cst_28 [0] : vector<16x128xf32> to vector<128xf32>
    %52 = vector.shape_cast %51 : vector<128xf32> to vector<1x128xf32>
    %53 = arith.addf %50, %52 : vector<1x128xf32>
    %c0_29 = arith.constant 0 : index
    %c0_30 = arith.constant 0 : index
    %c0_31 = arith.constant 0 : index
    %54 = vector.load %arg6[%c0_29, %c0_30, %c0_31] : memref<1x1x128xf32, #tpu.memory_space<vmem>>, vector<1x1x128xf32>
    %55 = vector.shape_cast %54 : vector<1x1x128xf32> to vector<1x128xf32>
    %56 = vector.shape_cast %53 : vector<1x128xf32> to vector<1x1x128xf32>
    tpu.vector_store %arg6[%c0_29, %c0_30, %c0_31], %56 {strides = array<i32>} : memref<1x1x128xf32, #tpu.memory_space<vmem>>, vector<1x1x128xf32>,
    %c0_32 = arith.constant 0 : index
    %c0_33 = arith.constant 0 : index
    %c0_34 = arith.constant 0 : index
    %57 = vector.load %arg7[%c0_32, %c0_33, %c0_34] : memref<1x1x128xf32, #tpu.memory_space<vmem>>, vector<1x1x128xf32>
    %58 = vector.shape_cast %57 : vector<1x1x128xf32> to vector<1x128xf32>
    %59 = arith.mulf %48, %48 : vector<16x128xf32>
    %cst_35 = arith.constant dense<0.000000e+00> : vector<128xf32>
    %60 = vector.multi_reduction <add>, %59, %cst_35 [0] : vector<16x128xf32> to vector<128xf32>
    %61 = vector.shape_cast %60 : vector<128xf32> to vector<1x128xf32>
    %62 = arith.addf %58, %61 : vector<1x128xf32>
    %c0_36 = arith.constant 0 : index
    %c0_37 = arith.constant 0 : index
    %c0_38 = arith.constant 0 : index
    %63 = vector.load %arg7[%c0_36, %c0_37, %c0_38] : memref<1x1x128xf32, #tpu.memory_space<vmem>>, vector<1x1x128xf32>
    %64 = vector.shape_cast %63 : vector<1x1x128xf32> to vector<1x128xf32>
    %65 = vector.shape_cast %62 : vector<1x128xf32> to vector<1x1x128xf32>
    tpu.vector_store %arg7[%c0_36, %c0_37, %c0_38], %65 {strides = array<i32>} : memref<1x1x128xf32, #tpu.memory_space<vmem>>, vector<1x1x128xf32>,
    return
  }
  func.func @transform_0(%arg0: i32, %arg1: i32) -> (i32, i32, i32) {
    %c0_i32 = arith.constant 0 : i32
    %c0_i32_0 = arith.constant 0 : i32
    %c0_i32_1 = arith.constant 0 : i32
    return %arg0, %c0_i32, %c0_i32_0 : i32, i32, i32
  }
  func.func @transform_1(%arg0: i32, %arg1: i32) -> (i32, i32) {
    %c0_i32 = arith.constant 0 : i32
    %c0_i32_0 = arith.constant 0 : i32
    %c0_i32_1 = arith.constant 0 : i32
    return %c0_i32, %c0_i32_0 : i32, i32
  }
  func.func @transform_2(%arg0: i32, %arg1: i32) -> (i32, i32) {
    %c0_i32 = arith.constant 0 : i32
    %c0_i32_0 = arith.constant 0 : i32
    %c0_i32_1 = arith.constant 0 : i32
    return %c0_i32, %c0_i32_0 : i32, i32
  }
  func.func @transform_3(%arg0: i32, %arg1: i32) -> (i32, i32, i32) {
    %c0_i32 = arith.constant 0 : i32
    %c0_i32_0 = arith.constant 0 : i32
    return %arg0, %arg1, %c0_i32 : i32, i32, i32
  }
  func.func @transform_4(%arg0: i32, %arg1: i32) -> (i32, i32, i32) {
    %c0_i32 = arith.constant 0 : i32
    %c0_i32_0 = arith.constant 0 : i32
    %c0_i32_1 = arith.constant 0 : i32
    return %arg0, %c0_i32, %c0_i32_0 : i32, i32, i32
  }
  func.func @transform_5(%arg0: i32, %arg1: i32) -> (i32, i32, i32) {
    %c0_i32 = arith.constant 0 : i32
    %c0_i32_0 = arith.constant 0 : i32
    %c0_i32_1 = arith.constant 0 : i32
    return %arg0, %c0_i32, %c0_i32_0 : i32, i32, i32
  }
}

</mosaic_0001>

<llo_original>
// kernel: tpu_custom_call.1
$region0: #{tpu_custom_call.1}
  #allocation0 [shape = 'u32[]', space=smem, size = 0x4, offset = 0x4, fixed_abs, tag = 'smem constant byte address 0x4 - core index']
  #allocation1 [shape = 'u32[144,128]{1,0:T(1,128)}', space=vmem, size = 0x12000, scoped, tag = 'internal scratch']
  %s0 = inlined_call_operand.vmem [shape: f32[2,20,16], index: 0, kind: input, shape index: {}]
  %s1 = inlined_call_operand.vmem [shape: f32[80,128], index: 1, kind: input, shape index: {}]
  %s2 = inlined_call_operand.vmem [shape: f32[1,128], index: 2, kind: input, shape index: {}]
  %s3 = inlined_call_operand.hbm [shape: f32[2,16,128], index: 3, kind: output, shape index: {0}]
  %s4 = inlined_call_operand.hbm [shape: f32[2,1,128], index: 4, kind: output, shape index: {1}]
  %s5 = inlined_call_operand.hbm [shape: f32[2,1,128], index: 5, kind: output, shape index: {2}]
  %6 = xla_tuple %s3, %s4, %s5
  %s7 = sld [smem:[#allocation0]]
  $region65: #{tpu_custom_call.1} parent=0
    _
  %s9 = ssub.s32 1, %s7
  %s10 = scalar_select 0, %s9, %s7
  $region1: #{tpu_custom_call.1} parent=0
    #allocation2 [shape = 'u8[16384]{0}', space=vmem, size = 0x4000, scoped, tag = 'output window, operand 0']
    #allocation3 [shape = 's32[2]{0}', space=sflag, size = 0x8, scoped, tag = 'scoped memory for tpu_custom_call.1']
    #allocation4 [shape = 'u8[1024]{0}', space=vmem, size = 0x400, scoped, tag = 'output window, operand 1']
    #allocation5 [shape = 's32[2]{0}', space=sflag, size = 0x8, scoped, tag = 'scoped memory for tpu_custom_call.1']
    #allocation6 [shape = 'u8[1024]{0}', space=vmem, size = 0x400, scoped, tag = 'output window, operand 2']
    %11 = vsyncpa [#allocation3], 0
    %s12 = scalar_lea.sflag [#allocation3], 1
    %13 = vsyncpa %s12, 0
    %14 = vsyncpa [#allocation5], 0
    %s15 = scalar_lea.sflag [#allocation5], 1
    %16 = vsyncpa %s15, 0
    loop: start=0, step=1, limit=4
    $region2: #{tpu_custom_call.1} parent=1 // loop_pre_header
      _
    $region3: #{tpu_custom_call.1} parent=1 // loop_header
      %s18 = sphi 0, %s22
      %p19 = scmp.ge.s32.totalorder %s18, 4
      %s25 = sphi 0, %s37
      %s26 = sphi 0, %s33
      %s27 = sphi 0, %s25
      %s28 = sphi 0, %s26
      %s29 = sphi 0, %s27
      %s30 = sphi 0, %s28
      %s40 = sphi 0, %s42
      %s43 = sphi 0, %s40
      %s44 = sphi 0, %s43
      %s60 = sphi 0, %s44
      %s64 = sphi 0, %s64
      %s66 = sphi 0, %s64
      %s67 = sphi 0, %s66
      %s81 = sphi 0, %s67
      %s85 = sphi 0, %s85
      %s87 = sphi 0, %s85
      %s88 = sphi 0, %s87
      %s102 = sphi 0, %s88
      %s110 = sphi 0, %s112
      %s113 = sphi 0, %s110
      %s114 = sphi 0, %s113
      %s130 = sphi 0, %s114
      %s136 = sphi 0, %s138
      %s139 = sphi 0, %s136
      %s140 = sphi 0, %s139
      %s156 = sphi 0, %s140
      %s162 = sphi 0, %s164
      %s165 = sphi 0, %s162
      %s166 = sphi 0, %s165
      %s182 = sphi 0, %s166
    $region4: #{tpu_custom_call.1} parent=1 // loop_header_branch
      %21 = sbr.rel (%p19) target = $region8
    $region5: #{tpu_custom_call.1} parent=1 // loop_body
      %s23 = ssub.s32 %s18, 1
      %s24 = ssub.s32 %s18, 2
      %s31 = sadd.s32 1, %s26
      %p32 = scmp.ge.s32.totalorder %s31, 1
      %s33 = scalar_select %p32, 0, %s31
      %s34 = sadd.s32 1, %s25
      %s35 = scalar_select %p32, %s34, %s25
      %p36 = scmp.ge.s32.totalorder %s35, 2
      %s37 = scalar_select %p36, 0, %s35
      %s38 = ssub.s32 %s25, %s37
      %p39 = scmp.eq.s32.totalorder %s38, 0
      %s41 = sadd.s32 %s40, 1
      %s42 = scalar_select %p39, %s40, %s41
      %p45 = pneg %p39
      %p46 = scmp.eq.s32.totalorder %s18, 1
      %p47 = por %p45, %p46
      %p48 = scmp.ne.s32.totalorder %s40, %s43
      %p49 = scmp.eq.s32.totalorder %s18, 0
      %p50 = por %p48, %p49
      %p51 = scmp.ne.s32.totalorder %s40, %s43
      %p52 = scmp.eq.s32.totalorder %s23, 1
      %p53 = por %p51, %p52
      %p54 = scmp.ne.s32.totalorder %s43, %s44
      %p55 = scmp.eq.s32.totalorder %s23, 0
      %p56 = por %p54, %p55
      %p57 = scmp.ne.s32.totalorder %s43, %s44
      %p58 = scmp.eq.s32.totalorder %s24, 1
      %p59 = por %p57, %p58
      %p61 = scmp.ne.s32.totalorder %s44, %s60
      %p62 = scmp.eq.s32.totalorder %s24, 0
      %p63 = por %p61, %p62
      %s65 = sadd.s32 %s64, 1
      %p68 = scmp.eq.s32.totalorder %s18, 1
      %p69 = scmp.ne.s32.totalorder %s64, %s66
      %p70 = scmp.eq.s32.totalorder %s18, 0
      %p71 = por %p69, %p70
      %p72 = scmp.ne.s32.totalorder %s64, %s66
      %p73 = scmp.eq.s32.totalorder %s23, 1
      %p74 = por %p72, %p73
      %p75 = scmp.ne.s32.totalorder %s66, %s67
      %p76 = scmp.eq.s32.totalorder %s23, 0
      %p77 = por %p75, %p76
      %p78 = scmp.ne.s32.totalorder %s66, %s67
      %p79 = scmp.eq.s32.totalorder %s24, 1
      %p80 = por %p78, %p79
      %p82 = scmp.ne.s32.totalorder %s67, %s81
      %p83 = scmp.eq.s32.totalorder %s24, 0
      %p84 = por %p82, %p83
      %s86 = sadd.s32 %s85, 1
      %p89 = scmp.eq.s32.totalorder %s18, 1
      %p90 = scmp.ne.s32.totalorder %s85, %s87
      %p91 = scmp.eq.s32.totalorder %s18, 0
      %p92 = por %p90, %p91
      %p93 = scmp.ne.s32.totalorder %s85, %s87
      %p94 = scmp.eq.s32.totalorder %s23, 1
      %p95 = por %p93, %p94
      %p96 = scmp.ne.s32.totalorder %s87, %s88
      %p97 = scmp.eq.s32.totalorder %s23, 0
      %p98 = por %p96, %p97
      %p99 = scmp.ne.s32.totalorder %s87, %s88
      %p100 = scmp.eq.s32.totalorder %s24, 1
      %p101 = por %p99, %p100
      %p103 = scmp.ne.s32.totalorder %s88, %s102
      %p104 = scmp.eq.s32.totalorder %s24, 0
      %p105 = por %p103, %p104
      %s106 = ssub.s32 %s25, %s37
      %s107 = ssub.s32 %s26, %s33
      %s108 = sor.u32 %s106, %s107
      %p109 = scmp.eq.s32.totalorder %s108, 0
      %s111 = sadd.s32 %s110, 1
      %s112 = scalar_select %p109, %s110, %s111
      %p115 = pneg %p109
      %p116 = scmp.eq.s32.totalorder %s18, 1
      %p117 = por %p115, %p116
      %p118 = scmp.ne.s32.totalorder %s110, %s113
      %p119 = scmp.eq.s32.totalorder %s18, 0
      %p120 = por %p118, %p119
      %p121 = scmp.ne.s32.totalorder %s110, %s113
      %p122 = scmp.eq.s32.totalorder %s23, 1
      %p123 = por %p121, %p122
      %p124 = scmp.ne.s32.totalorder %s113, %s114
      %p125 = scmp.eq.s32.totalorder %s23, 0
      %p126 = por %p124, %p125
      %p127 = scmp.ne.s32.totalorder %s113, %s114
      %p128 = scmp.eq.s32.totalorder %s24, 1
      %p129 = por %p127, %p128
      %p131 = scmp.ne.s32.totalorder %s114, %s130
      %p132 = scmp.eq.s32.totalorder %s24, 0
      %p133 = por %p131, %p132
      %s134 = ssub.s32 %s25, %s37
      %p135 = scmp.eq.s32.totalorder %s134, 0
      %s137 = sadd.s32 %s136, 1
      %s138 = scalar_select %p135, %s136, %s137
      %p141 = pneg %p135
      %p142 = scmp.eq.s32.totalorder %s18, 1
      %p143 = por %p141, %p142
      %p144 = scmp.ne.s32.totalorder %s136, %s139
      %p145 = scmp.eq.s32.totalorder %s18, 0
      %p146 = por %p144, %p145
      %p147 = scmp.ne.s32.totalorder %s136, %s139
      %p148 = scmp.eq.s32.totalorder %s23, 1
      %p149 = por %p147, %p148
      %p150 = scmp.ne.s32.totalorder %s139, %s140
      %p151 = scmp.eq.s32.totalorder %s23, 0
      %p152 = por %p150, %p151
      %p153 = scmp.ne.s32.totalorder %s139, %s140
      %p154 = scmp.eq.s32.totalorder %s24, 1
      %p155 = por %p153, %p154
      %p157 = scmp.ne.s32.totalorder %s140, %s156
      %p158 = scmp.eq.s32.totalorder %s24, 0
      %p159 = por %p157, %p158
      %s160 = ssub.s32 %s25, %s37
      %p161 = scmp.eq.s32.totalorder %s160, 0
      %s163 = sadd.s32 %s162, 1
      %s164 = scalar_select %p161, %s162, %s163
      %p167 = pneg %p161
      %p168 = scmp.eq.s32.totalorder %s18, 1
      %p169 = por %p167, %p168
      %p170 = scmp.ne.s32.totalorder %s162, %s165
      %p171 = scmp.eq.s32.totalorder %s18, 0
      %p172 = por %p170, %p171
      %p173 = scmp.ne.s32.totalorder %s162, %s165
      %p174 = scmp.eq.s32.totalorder %s23, 1
      %p175 = por %p173, %p174
      %p176 = scmp.ne.s32.totalorder %s165, %s166
      %p177 = scmp.eq.s32.totalorder %s23, 0
      %p178 = por %p176, %p177
      %p179 = scmp.ne.s32.totalorder %s165, %s166
      %p180 = scmp.eq.s32.totalorder %s24, 1
      %p181 = por %p179, %p180
      %p183 = scmp.ne.s32.totalorder %s166, %s182
      %p184 = scmp.eq.s32.totalorder %s24, 0
      %p185 = por %p183, %p184
      %p186 = scmp.le.s32.totalorder 1, %s18
      %p187 = scmp.lt.s32.totalorder %s18, 3
      %p188 = pnand %p186, %p187
      %p189 = pneg %p188
      // Predicated region
      $region9: #{tpu_custom_call.1} parent=5 // pred_check
        _
      $region10: #{tpu_custom_call.1} parent=5 // pred_check_branch
        %191 = sbr.rel (%p188) target = $region12
      $region11: #{tpu_custom_call.1} parent=5 // pred_region
        %s192 = ssub.s32 %s18, 1
        // Predicated region
        $region13: #{tpu_custom_call.1} parent=11 // pred_check
          %p193 = pneg %p77
        $region14: #{tpu_custom_call.1} parent=11 // pred_check_branch
          %195 = sbr.rel (%p193) target = $region16
        $region15: #{tpu_custom_call.1} parent=11 // pred_region
          _
        $region16: #{tpu_custom_call.1} parent=11 // pred_fallthru
          _
        // Predicated region
        $region17: #{tpu_custom_call.1} parent=11 // pred_check
          %p196 = pneg %p98
        $region18: #{tpu_custom_call.1} parent=11 // pred_check_branch
          %198 = sbr.rel (%p196) target = $region20
        $region19: #{tpu_custom_call.1} parent=11 // pred_region
          _
        $region20: #{tpu_custom_call.1} parent=11 // pred_fallthru
          _
      $region12: #{tpu_custom_call.1} parent=5 // pred_fallthru
        _
      %p199 = scmp.lt.s32.totalorder %s18, 2
      // Predicated region
      $region21: #{tpu_custom_call.1} parent=5 // pred_check
        %p200 = pneg %p199
      $region22: #{tpu_custom_call.1} parent=5 // pred_check_branch
        %202 = sbr.rel (%p200) target = $region24
      $region23: #{tpu_custom_call.1} parent=5 // pred_region
        // Predicated region
        $region25: #{tpu_custom_call.1} parent=23 // pred_check
          %p203 = pneg %p50
        $region26: #{tpu_custom_call.1} parent=23 // pred_check_branch
          %205 = sbr.rel (%p203) target = $region28
        $region27: #{tpu_custom_call.1} parent=23 // pred_region
          %p206 = scmp.lt.s32.totalorder %s25, 1
          %s207 = scalar_select %p206, %s25, 1
          %s208 = smul.addr %s207, 3
          %s209 = smul.addr %s208, 8
          %s210 = scalar_lea.vmem %s0, %s209
        $region28: #{tpu_custom_call.1} parent=23 // pred_fallthru
          _
      $region24: #{tpu_custom_call.1} parent=5 // pred_fallthru
        _
      %p211 = scmp.le.s32.totalorder 1, %s18
      %p212 = scmp.lt.s32.totalorder %s18, 3
      %p213 = pnand %p211, %p212
      %p214 = pneg %p213
      // Predicated region
      $region29: #{tpu_custom_call.1} parent=5 // pred_check
        _
      $region30: #{tpu_custom_call.1} parent=5 // pred_check_branch
        %216 = sbr.rel (%p213) target = $region32
      $region31: #{tpu_custom_call.1} parent=5 // pred_region
        %s217 = ssub.s32 %s18, 1
        %p218 = scmp.lt.s32.totalorder %s27, 1
        %s219 = scalar_select %p218, %s27, 1
        %s220 = smul.addr %s219, 3
        %s221 = smul.addr %s220, 8
        %s222 = scalar_lea.vmem %s0, %s221
        %p223 = pneg %p56
        %p224 = pneg %p53
        %p225 = pneg %p77
        %p226 = pneg %p74
        %p227 = pneg %p98
        %p228 = pneg %p95
        %p229 = pneg %p126
        %p230 = pneg %p123
        %s231 = sand.u32 %s113, 1
        %s232 = scalar_lea.sflag [#allocation3], %s231
        %s233 = sand.u32 %s113, 1
        %s234 = smul.addr %s233, 16
        %s235 = scalar_lea.vmem [#allocation2], %s234
        %p236 = pneg %p152
        %p237 = pneg %p149
        %s238 = sand.u32 %s23, 1
        %s239 = scalar_lea.sflag [#allocation5], %s238
        %s240 = sand.u32 %s139, 1
        %s241 = scalar_lea.vmem [#allocation4], %s240
        %p242 = pneg %p178
        %p243 = pneg %p175
        %s244 = sand.u32 %s23, 1
        %s245 = scalar_lea.sflag [#allocation5], %s244
        %s246 = sand.u32 %s165, 1
        %s247 = scalar_lea.vmem [#allocation6], %s246
        %p248 = scmp.lt.s32.totalorder %s27, 1
        %s249 = scalar_select %p248, %s27, 1
        %s250 = smul.addr %s249, 3
        %s251 = smul.addr %s250, 8
        %s252 = scalar_lea.vmem %s0, %s251
        %s253 = smul.u32 2, %s28
        %s254 = smul.u32 %s28, 16
        %p255 = scmp.eq.s32.totalorder %s28, 0
        // Predicated region
        $region33: #{tpu_custom_call.1} parent=31 // pred_check
          %p256 = pneg %p255
        $region34: #{tpu_custom_call.1} parent=31 // pred_check_branch
          %258 = sbr.rel (%p256) target = $region36
        $region35: #{tpu_custom_call.1} parent=31 // pred_region
          %259 = vst [vmem:[%s241] sm:$0x1] 0.0
          %260 = vst [vmem:[%s247] sm:$0x1] 0.0
        $region36: #{tpu_custom_call.1} parent=31 // pred_fallthru
          _
        %s261 = scalar_lea.vmem %s252, %s254
        %v262 = vld [vmem:[%s261] sm:$0xff]
        %v263 = vld [vmem:[%s261 + $0x8] sm:$0xff]
        %s264 = sadd.s32 %s254, 1
        %s265 = scalar_lea.vmem %s252, %s264
        %v266 = vld [vmem:[%s265] sm:$0xff]
        %v267 = vld [vmem:[%s265 + $0x8] sm:$0xff]
        %s268 = sadd.s32 %s254, 2
        %s269 = scalar_lea.vmem %s252, %s268
        %v270 = vld [vmem:[%s269] sm:$0xff]
        %v271 = vld [vmem:[%s269 + $0x8] sm:$0xff]
        %s272 = sadd.s32 %s254, 3
        %s273 = scalar_lea.vmem %s252, %s272
        %v274 = vld [vmem:[%s273] sm:$0xff]
        %v275 = vld [vmem:[%s273 + $0x8] sm:$0xff]
        %s276 = sadd.s32 %s254, 4
        %s277 = scalar_lea.vmem %s252, %s276
        %v278 = vld [vmem:[%s277] sm:$0xff]
        %v279 = vld [vmem:[%s277 + $0x8] sm:$0xff]
        %282 = vrot.lane.b32.xlu0 %v266, 16
        %v283 = vpop.permute.xlu0 %282
        %284 = vrot.lane.b32.xlu0 %v267, 16
        %v285 = vpop.permute.xlu0 %284
        %290 = vrot.lane.b32.xlu0 %v270, 32
        %v291 = vpop.permute.xlu0 %290
        %292 = vrot.lane.b32.xlu0 %v271, 32
        %v293 = vpop.permute.xlu0 %292
        %298 = vrot.lane.b32.xlu0 %v274, 48
        %v299 = vpop.permute.xlu0 %298
        %300 = vrot.lane.b32.xlu0 %v275, 48
        %v301 = vpop.permute.xlu0 %300
        %306 = vrot.lane.b32.xlu0 %v278, 64
        %v307 = vpop.permute.xlu0 %306
        %308 = vrot.lane.b32.xlu0 %v279, 64
        %v309 = vpop.permute.xlu0 %308
        %vm312 = vcmask 130048
        %v313 = vsel %vm312, %v262, %v283
        %v314 = vsel %vm312, %v263, %v285
        %vm315 = vcmask 261120
        %v316 = vsel %vm315, %v313, %v291
        %v317 = vsel %vm315, %v314, %v293
        %vm318 = vcmask 392192
        %v319 = vsel %vm318, %v316, %v299
        %v320 = vsel %vm318, %v317, %v301
        %vm321 = vcmask 523264
        %v322 = vsel %vm321, %v319, %v307
        %v323 = vsel %vm321, %v320, %v309
        %v324 = vld [vmem:[%s1] sm:$0xff]
        %v325 = vld [vmem:[%s1 + $0x8] sm:$0xff]
        %v326 = vld [vmem:[%s1 + $0x10] sm:$0xff]
        %v327 = vld [vmem:[%s1 + $0x18] sm:$0xff]
        %v328 = vld [vmem:[%s1 + $0x20] sm:$0xff]
        %v329 = vld [vmem:[%s1 + $0x28] sm:$0xff]
        %v330 = vld [vmem:[%s1 + $0x30] sm:$0xff]
        %v331 = vld [vmem:[%s1 + $0x38] sm:$0xff]
        %v332 = vld [vmem:[%s1 + $0x40] sm:$0xff]
        %v333 = vld [vmem:[%s1 + $0x48] sm:$0xff]
        %v334 = vld [vmem:[%s2] sm:$0x1]
        %v336 = vlaneseq
        %v337 = vshrl.u32 %v336, 7
        %v338 = vsub.s32 0, %v337
        %v339 = vrot.slane %v334, %v338
        %vm341 = vcmask 654336
        %v343 = vsel %vm341, %v322, 0
        %v346 = vsel %vm341, %v323, 0
        %348 = vmatprep.subr.mxu0 0.0
        %349 = vmatpush1.msra.mxu0 %v324
        %350 = vmatprep.subr.mxu0 0.0
        %351 = vmatpush1.msra.mxu0 %v325
        %352 = vmatprep.subr.mxu0 0.0
        %353 = vmatpush1.msra.mxu0 %v326
        %354 = vmatprep.subr.mxu0 0.0
        %355 = vmatpush1.msra.mxu0 %v327
        %356 = vmatprep.subr.mxu0 0.0
        %357 = vmatpush1.msra.mxu0 %v328
        %358 = vmatprep.subr.mxu0 0.0
        %359 = vmatpush1.msra.mxu0 %v329
        %360 = vmatprep.subr.mxu0 0.0
        %361 = vmatpush1.msra.mxu0 %v330
        %362 = vmatprep.subr.mxu0 0.0
        %363 = vmatpush1.msra.mxu0 %v331
        %364 = vmatprep.subr.mxu0 0.0
        %365 = vmatpush1.msra.mxu0 %v332
        %366 = vmatprep.subr.mxu0 0.0
        %367 = vmatpush1.msra.mxu0 %v333
        %368 = vmatprep.subr.mxu0 0.0
        %369 = vmatpush1.msra.mxu0 0.0
        %370 = vmatprep.subr.mxu0 0.0
        %371 = vmatpush1.msra.mxu0 0.0
        %372 = vmatprep.subr.mxu0 0.0
        %373 = vmatpush1.msra.mxu0 0.0
        %374 = vmatprep.subr.mxu0 0.0
        %375 = vmatpush1.msra.mxu0 0.0
        %376 = vmatprep.subr.mxu0 0.0
        %377 = vmatpush1.msra.mxu0 0.0
        %378 = vmatprep.subr.mxu0 0.0
        %379 = vmatpush1.msra.mxu0 0.0
        %380 = vmatprep.subr.mxu0 0.0
        %381 = vmatpush1.msra.mxu0 0.0
        %382 = vmatprep.subr.mxu0 0.0
        %383 = vmatpush1.msra.mxu0 0.0
        %384 = vmatprep.subr.mxu0 0.0
        %385 = vmatpush1.msra.mxu0 0.0
        %386 = vmatprep.subr.mxu0 0.0
        %387 = vmatpush1.msra.mxu0 0.0
        %388 = vmatprep.subr.mxu0 0.0
        %389 = vmatpush1.msra.mxu0 0.0
        %390 = vmatprep.subr.mxu0 0.0
        %391 = vmatpush1.msra.mxu0 0.0
        %392 = vmatprep.subr.mxu0 0.0
        %393 = vmatpush1.msra.mxu0 0.0
        %394 = vmatprep.subr.mxu0 0.0
        %395 = vmatpush1.msra.mxu0 0.0
        %396 = vmatprep.subr.mxu0 0.0
        %397 = vmatpush1.msra.mxu0 0.0
        %398 = vmatprep.subr.mxu0 0.0
        %399 = vmatpush1.msra.mxu0 0.0
        %400 = vmatprep.subr.mxu0 0.0
        %401 = vmatpush1.msra.mxu0 0.0
        %402 = vmatprep.subr.mxu0 0.0
        %403 = vmatpush1.msra.mxu0 0.0
        %404 = vmatprep.subr.mxu0 0.0
        %405 = vmatpush1.msra.mxu0 0.0
        %406 = vmatprep.subr.mxu0 0.0
        %407 = vmatpush1.msra.mxu0 0.0
        %408 = vmatprep.subr.mxu0 0.0
        %409 = vmatpush1.msra.mxu0 0.0
        %410 = vmatprep.subr.mxu0 0.0
        %411 = vmatpush1.msra.mxu0 0.0
        %412 = vmatprep.mubr.f32.mxu0 0.0
        %413 = vmatmul.mubr.f32.gmra.mrb[0].mxu0 %v343
        %v414 = vpop.f32.mrb[0].mxu0
        %v415 = vadd.f32 %v339, %v414
        %v416 = vpop.f32.mrb[0].mxu0
        %417 = vmatprep.mubr.f32.mxu0 0.0
        %418 = vmatmul.mubr.f32.gmra.mrb[0].mxu0 %v346
        %v419 = vpop.f32.mrb[0].mxu0
        %v420 = vadd.f32 %v339, %v419
        %v421 = vpop.f32.mrb[0].mxu0
        %422 = vdwg.mxu0
        %v423 = vmax.f32 %v415, 0.0
        %v424 = vmax.f32 %v420, 0.0
        %425 = vst [vmem:[%s235] sm:$0xff] %v423
        %426 = vst [vmem:[%s235 + $0x8] sm:$0xff] %v424
        %v427 = vlaneseq
        %v428 = vshrl.u32 %v427, 7
        %v429 = vadd.s32 %v428, 8
        %v430 = vstv %s254
        %v431 = vadd.s32 %v428, %v430
        %v432 = vadd.s32 %v429, %v430
        %vm433 = vcmp.lt.s32.totalorder %v431, 12
        %vm434 = vcmp.lt.s32.totalorder %v432, 12
        %v435 = vsel %vm433, 1, 0
        %v436 = vsel %vm434, 1, 0
        %vm437 = vcmp.eq.s32.totalorder %v435, 1
        %vm438 = vcmp.eq.s32.totalorder %v436, 1
        %v439 = vsel %vm437, %v423, 0.0
        %v440 = vsel %vm438, %v424, 0.0
        %v441 = vld [vmem:[%s241] sm:$0x1]
        %v442 = vadd.f32 %v439, %v440
        %v443 = vrot.slane %v442, 4
        %v444 = vadd.f32 %v442, %v443
        %v445 = vrot.slane %v444, 2
        %v446 = vadd.f32 %v444, %v445
        %v447 = vrot.slane %v446, 1
        %v448 = vadd.f32 %v446, %v447
        %v449 = vadd.f32 %v441, %v448
        %450 = vst [vmem:[%s241] sm:$0x1] %v449
        %v451 = vld [vmem:[%s247] sm:$0x1]
        %v452 = vmul.f32 %v439, %v439
        %v453 = vmul.f32 %v440, %v440
        %v454 = vadd.f32 %v452, %v453
        %v455 = vrot.slane %v454, 4
        %v456 = vadd.f32 %v454, %v455
        %v457 = vrot.slane %v456, 2
        %v458 = vadd.f32 %v456, %v457
        %v459 = vrot.slane %v458, 1
        %v460 = vadd.f32 %v458, %v459
        %v461 = vadd.f32 %v451, %v460
        %462 = vst [vmem:[%s247] sm:$0x1] %v461
        %s463 = sand.u32 %s113, 1
        %s464 = scalar_lea.sflag [#allocation3], %s463
        %s465 = sand.u32 %s113, 1
        %s466 = smul.addr %s465, 16
        %s467 = scalar_lea.vmem [#allocation2], %s466
        %s468 = sand.u32 %s23, 1
        %s469 = scalar_lea.sflag [#allocation5], %s468
        %s470 = sand.u32 %s139, 1
        %s471 = scalar_lea.vmem [#allocation4], %s470
        %s472 = sand.u32 %s23, 1
        %s473 = scalar_lea.sflag [#allocation5], %s472
        %s474 = sand.u32 %s165, 1
        %s475 = scalar_lea.vmem [#allocation6], %s474
        // Predicated region
        $region37: #{tpu_custom_call.1} parent=31 // pred_check
          %p476 = pneg %p123
        $region38: #{tpu_custom_call.1} parent=31 // pred_check_branch
          %478 = sbr.rel (%p476) target = $region40
        $region39: #{tpu_custom_call.1} parent=31 // pred_region
          %s479 = smul.u32 2, %s28
          %s481 = ssub.s32 256, 256
          %482 = vsyncadd %s464, %s481
          %s483 = smul.addr %s27, 2
          %s484 = sadd.s32 %s479, %s483
          %s485 = smul.addr %s484, 128
          %s486 = scalar_lea.hbm %s3, %s485
          %s487 = sshll.u32 %s467, 4
          %s488 = int_to_ptr.vmem [resolvable:$true] %s487
          %493 = dma.vmem_to_hbm [thread:$0]  %s488, 256, %s486, %s464, 128, 128, 8
        $region40: #{tpu_custom_call.1} parent=31 // pred_fallthru
          _
        // Predicated region
        $region41: #{tpu_custom_call.1} parent=31 // pred_check
          %p494 = pneg %p149
        $region42: #{tpu_custom_call.1} parent=31 // pred_check_branch
          %496 = sbr.rel (%p494) target = $region44
        $region43: #{tpu_custom_call.1} parent=31 // pred_region
          %s498 = ssub.s32 16, 16
          %499 = vsyncadd %s469, %s498
          %s500 = smul.addr %s27, 16
          %s501 = scalar_lea.hbm %s4, %s500
          %s503 = sshll.u32 %s471, 4
          %s504 = int_to_ptr.vmem [resolvable:$true] %s503
          %506 = dma.vmem_to_hbm [thread:$0]  %s504, 16, %s501, %s469
        $region44: #{tpu_custom_call.1} parent=31 // pred_fallthru
          _
        // Predicated region
        $region45: #{tpu_custom_call.1} parent=31 // pred_check
          %p507 = pneg %p175
        $region46: #{tpu_custom_call.1} parent=31 // pred_check_branch
          %509 = sbr.rel (%p507) target = $region48
        $region47: #{tpu_custom_call.1} parent=31 // pred_region
          %s511 = ssub.s32 16, 16
          %512 = vsyncadd %s473, %s511
          %s513 = smul.addr %s27, 16
          %s514 = scalar_lea.hbm %s5, %s513
          %s516 = sshll.u32 %s475, 4
          %s517 = int_to_ptr.vmem [resolvable:$true] %s516
          %519 = dma.vmem_to_hbm [thread:$0]  %s517, 16, %s514, %s473
        $region48: #{tpu_custom_call.1} parent=31 // pred_fallthru
          _
      $region32: #{tpu_custom_call.1} parent=5 // pred_fallthru
        _
      %p520 = scmp.le.s32.totalorder 2, %s18
      // Predicated region
      $region49: #{tpu_custom_call.1} parent=5 // pred_check
        %p521 = pneg %p520
      $region50: #{tpu_custom_call.1} parent=5 // pred_check_branch
        %523 = sbr.rel (%p521) target = $region52
      $region51: #{tpu_custom_call.1} parent=5 // pred_region
        %s524 = ssub.s32 %s18, 2
        // Predicated region
        $region53: #{tpu_custom_call.1} parent=51 // pred_check
          %p525 = pneg %p129
        $region54: #{tpu_custom_call.1} parent=51 // pred_check_branch
          %527 = sbr.rel (%p525) target = $region56
        $region55: #{tpu_custom_call.1} parent=51 // pred_region
          %s528 = sand.u32 %s114, 1
          %s529 = scalar_lea.sflag [#allocation3], %s528
          %s530 = sand.u32 %s114, 1
          %s531 = smul.addr %s530, 16
          %s532 = scalar_lea.vmem [#allocation2], %s531
          %533 = dma.done %s529, 256
        $region56: #{tpu_custom_call.1} parent=51 // pred_fallthru
          _
        // Predicated region
        $region57: #{tpu_custom_call.1} parent=51 // pred_check
          %p534 = pneg %p155
        $region58: #{tpu_custom_call.1} parent=51 // pred_check_branch
          %536 = sbr.rel (%p534) target = $region60
        $region59: #{tpu_custom_call.1} parent=51 // pred_region
          %s537 = sand.u32 %s24, 1
          %s538 = scalar_lea.sflag [#allocation5], %s537
          %s539 = sand.u32 %s140, 1
          %s540 = scalar_lea.vmem [#allocation4], %s539
          %541 = dma.done %s538, 16
        $region60: #{tpu_custom_call.1} parent=51 // pred_fallthru
          _
        // Predicated region
        $region61: #{tpu_custom_call.1} parent=51 // pred_check
          %p542 = pneg %p181
        $region62: #{tpu_custom_call.1} parent=51 // pred_check_branch
          %544 = sbr.rel (%p542) target = $region64
        $region63: #{tpu_custom_call.1} parent=51 // pred_region
          %s545 = sand.u32 %s24, 1
          %s546 = scalar_lea.sflag [#allocation5], %s545
          %s547 = sand.u32 %s166, 1
          %s548 = scalar_lea.vmem [#allocation6], %s547
          %549 = dma.done %s546, 16
        $region64: #{tpu_custom_call.1} parent=51 // pred_fallthru
          _
      $region52: #{tpu_custom_call.1} parent=5 // pred_fallthru
        _
    $region6: #{tpu_custom_call.1} parent=1 // loop_footer
      %s22 = sadd.s32 1, %s18
    $region7: #{tpu_custom_call.1} parent=1 // loop_footer_branch
      %17 = sbr.rel target = $region3
    $region8: #{tpu_custom_call.1} parent=1 // loop_exit
      _
    %550 = vsyncpa [#allocation3], 1
    %s551 = scalar_lea.sflag [#allocation3], 1
    %552 = vsyncpa %s551, 1
    %553 = vsyncpa [#allocation5], 1
    %s554 = scalar_lea.sflag [#allocation5], 1
    %555 = vsyncpa %s554, 1

</llo_original>
